<compile_context>
chip_gen: v6e
topology: v6e:2x2x1
jax: 0.10.0
libtpu: 0.0.40
codegen_flags: <defaults>
</compile_context>

<pallas_src>
import functools
import math

import jax
import jax.numpy as jnp
from jax.experimental import pallas as pl
from jax.experimental.pallas import tpu as pltpu

# ----------------------------------------------------------------------------
# Config (stand-in for the module's CONFIG dict)
# ----------------------------------------------------------------------------
CONFIG = {
    "tf": {"embedding_dim": 32},
    "pe": {"max_len": 64, "dropout_prob": 0.1},
}

_LANE = 128            # TPU lane width
_MAX_TILE_ROWS = 2048  # 2048 * 128 * 4 B = 1 MiB per f32 buffer per block


def _round_up(x: int, m: int) -> int:
    return ((x + m - 1) // m) * m


# ----------------------------------------------------------------------------
# __init__ glue: build the sin/cos positional-encoding buffer [max_len, 1, D]
# ----------------------------------------------------------------------------
def make_pos_encoding(max_len: int, embedding_dim: int) -> jnp.ndarray:
    pos = jnp.arange(0, max_len, dtype=jnp.float32).reshape(-1, 1)            # (L, 1)
    div = jnp.exp(
        jnp.arange(0, embedding_dim, 2, dtype=jnp.float32)
        * (-math.log(10000.0) / embedding_dim)
    )                                                                          # (D/2,)
    pe = jnp.zeros((max_len, embedding_dim), dtype=jnp.float32)
    pe = pe.at[:, 0::2].set(jnp.sin(pos * div))
    pe = pe.at[:, 1::2].set(jnp.cos(pos * div))
    # unsqueeze(0).transpose(0, 1) -> (max_len, 1, D)
    return pe.reshape(max_len, 1, embedding_dim)


# ----------------------------------------------------------------------------
# Pallas kernels (lane-dense 2D tiles)
# ----------------------------------------------------------------------------
def _add_pe_kernel(x_ref, pe_ref, o_ref):
    # eval / dropout_prob == 0 path: plain elementwise add
    o_ref[...] = (x_ref[...] + pe_ref[...]).astype(o_ref.dtype)


def _add_pe_dropout_kernel(x_ref, pe_ref, bits_ref, o_ref, *, keep_prob):
    # train path: add + inverted dropout via integer threshold compare
    y = x_ref[...] + pe_ref[...]
    threshold = jnp.uint32(min(int(keep_prob * float(1 << 32)), (1 << 32) - 1))
    keep = bits_ref[...] < threshold              # P(keep) == keep_prob
    scale = jnp.asarray(1.0 / keep_prob, dtype=y.dtype)
    o_ref[...] = jnp.where(keep, y * scale, jnp.zeros_like(y)).astype(o_ref.dtype)


# ----------------------------------------------------------------------------
# Forward wrapper
# ----------------------------------------------------------------------------
def positional_encoding_forward(
    token_embedding: jnp.ndarray,   # (S, B, D)
    pos_encoding: jnp.ndarray,      # (max_len, 1, D)
    *,
    key=None,
    dropout_prob: float = CONFIG["pe"]["dropout_prob"],
    train: bool = True,
) -> jnp.ndarray:
    S, B, D = token_embedding.shape
    dtype = token_embedding.dtype

    # Pre-broadcast the (tiny) positional table over batch -> pure lane add.
    pe_full = jnp.broadcast_to(pos_encoding[:S].astype(dtype), (S, B, D))

    apply_dropout = bool(train) and float(dropout_prob) > 0.0

    # ---- lane-dense 2D layout: flatten to (rows, 128), pad to tile multiple
    n = S * B * D
    rows = pl.cdiv(n, _LANE)
    tile_rows = min(_MAX_TILE_ROWS, _round_up(rows, 8))   # sublane-aligned
    rows_pad = _round_up(rows, tile_rows)
    n_pad = rows_pad * _LANE

    def to_2d(a):
        flat = a.reshape(-1)
        if n_pad != n:
            flat = jnp.pad(flat, (0, n_pad - n))
        return flat.reshape(rows_pad, _LANE)

    x2 = to_2d(token_embedding)
    pe2 = to_2d(pe_full)

    grid = (rows_pad // tile_rows,)
    spec = pl.BlockSpec((tile_rows, _LANE), lambda i: (i, 0))
    out_shape = jax.ShapeDtypeStruct((rows_pad, _LANE), dtype)
    cparams = pltpu.CompilerParams(dimension_semantics=("parallel",))

    if apply_dropout:
        if key is None:
            key = jax.random.PRNGKey(0)
        bits = jax.random.bits(key, (rows_pad, _LANE), dtype=jnp.uint32)
        kernel = functools.partial(
            _add_pe_dropout_kernel, keep_prob=float(1.0 - dropout_prob)
        )
        out2 = pl.pallas_call(
            kernel,
            out_shape=out_shape,
            grid=grid,
            in_specs=[spec, spec, spec],
            out_specs=spec,
            compiler_params=cparams,
        )(x2, pe2, bits)
        # TODO(synk): the dropout mask comes from JAX's PRNG, so it cannot
        # bit-match torch.nn.Dropout's RNG stream (semantics are identical).
    else:
        out2 = pl.pallas_call(
            _add_pe_kernel,
            out_shape=out_shape,
            grid=grid,
            in_specs=[spec, spec],
            out_specs=spec,
            compiler_params=cparams,
        )(x2, pe2)

    return out2.reshape(-1)[:n].reshape(S, B, D)


# ----------------------------------------------------------------------------
# Demo / self-check
# ----------------------------------------------------------------------------
if __name__ == "__main__":
    D = CONFIG["tf"]["embedding_dim"]
    max_len = CONFIG["pe"]["max_len"]
    drop_p = CONFIG["pe"]["dropout_prob"]

    S, B = 8, 2   # small seq / batch consistent with the module's [S, B, D] layout

    root = jax.random.PRNGKey(0)
    k_x, k_drop = jax.random.split(root)
    token_embedding = jax.random.normal(k_x, (S, B, D), dtype=jnp.float32)

    pos_encoding = make_pos_encoding(max_len, D)
    ref = token_embedding + pos_encoding[:S]

    # 1) eval-mode path (dropout off) must match the plain-JAX reference
    out_eval = positional_encoding_forward(
        token_embedding, pos_encoding, dropout_prob=0.0, train=False
    )
    jax.block_until_ready(out_eval)
    assert out_eval.shape == (S, B, D)
    assert jnp.allclose(out_eval, ref, atol=1e-6, rtol=1e-6)

    # 2) train-mode path with dropout
    out_train = positional_encoding_forward(
        token_embedding, pos_encoding, key=k_drop,
        dropout_prob=drop_p, train=True
    )
    jax.block_until_ready(out_train)
    assert out_train.shape == (S, B, D)
    # every surviving element is (x+pe)/keep_prob, dropped elements are 0
    keep_prob = 1.0 - drop_p
    scaled = ref / keep_prob
    match = jnp.isclose(out_train, scaled, atol=1e-5) | jnp.isclose(out_train, 0.0)
    assert bool(jnp.all(match))
    # at least something survived (keep_prob = 0.9, 512 elements)
    assert int(jnp.sum(out_train != 0.0)) > 0

    print("KERNEL_OK")
</pallas_src>

<mosaic_0001>
module attributes {stable_mosaic.version = 11 : i64} {
  func.func @_add_pe_kernel(%arg0: i32, %arg1: memref<8x128xf32, #tpu.memory_space<vmem>>, %arg2: memref<8x128xf32, #tpu.memory_space<vmem>>, %arg3: memref<8x128xf32, #tpu.memory_space<vmem>>) attributes {dimension_semantics = [#tpu.dimension_semantics<parallel>], iteration_bounds = array<i64: 1>, scalar_prefetch = 0 : i64, scratch_operands = 0 : i64, tpu.core_type = #tpu.core_type<tc>, window_params = [{transform_indices = @transform_0, window_bounds = array<i64: 8, 128>}, {transform_indices = @transform_1, window_bounds = array<i64: 8, 128>}, {transform_indices = @transform_2, window_bounds = array<i64: 8, 128>}]} {
    %c0 = arith.constant 0 : index
    %c0_0 = arith.constant 0 : index
    %0 = vector.load %arg1[%c0, %c0_0] : memref<8x128xf32, #tpu.memory_space<vmem>>, vector<8x128xf32>
    %c0_1 = arith.constant 0 : index
    %c0_2 = arith.constant 0 : index
    %1 = vector.load %arg2[%c0_1, %c0_2] : memref<8x128xf32, #tpu.memory_space<vmem>>, vector<8x128xf32>
    %2 = arith.addf %0, %1 : vector<8x128xf32>
    %c0_3 = arith.constant 0 : index
    %c0_4 = arith.constant 0 : index
    %3 = vector.load %arg3[%c0_3, %c0_4] : memref<8x128xf32, #tpu.memory_space<vmem>>, vector<8x128xf32>
    tpu.vector_store %arg3[%c0_3, %c0_4], %2 {strides = array<i32>} : memref<8x128xf32, #tpu.memory_space<vmem>>, vector<8x128xf32>,
    return
  }
  func.func @transform_0(%arg0: i32) -> (i32, i32) {
    %c0_i32 = arith.constant 0 : i32
    %c0_i32_0 = arith.constant 0 : i32
    return %arg0, %c0_i32 : i32, i32
  }
  func.func @transform_1(%arg0: i32) -> (i32, i32) {
    %c0_i32 = arith.constant 0 : i32
    %c0_i32_0 = arith.constant 0 : i32
    return %arg0, %c0_i32 : i32, i32
  }
  func.func @transform_2(%arg0: i32) -> (i32, i32) {
    %c0_i32 = arith.constant 0 : i32
    %c0_i32_0 = arith.constant 0 : i32
    return %arg0, %c0_i32 : i32, i32
  }
}

</mosaic_0001>

<llo_original>
// kernel: tpu_custom_call.1
$region0: #{tpu_custom_call.1}
  #allocation0 [shape = 'u32[]', space=smem, size = 0x4, offset = 0x4, fixed_abs, tag = 'smem constant byte address 0x4 - core index']
  #allocation1 [shape = 'u32[144,128]{1,0:T(1,128)}', space=vmem, size = 0x12000, scoped, tag = 'internal scratch']
  %s0 = inlined_call_operand.hbm [shape: f32[8,128], index: 0, kind: input, shape index: {}]
  %s1 = inlined_call_operand.hbm [shape: f32[8,128], index: 1, kind: input, shape index: {}]
  %s2 = inlined_call_operand.hbm [shape: f32[8,128], index: 2, kind: output, shape index: {}]
  %s3 = sld [smem:[#allocation0]]
  $region26: #{tpu_custom_call.1} parent=0
    _
  %s5 = ssub.s32 1, %s3
  %s6 = scalar_select 0, %s5, %s3
  $region1: #{tpu_custom_call.1} parent=0
    #allocation2 [shape = 'u8[4096]{0}', space=vmem, size = 0x1000, scoped, tag = 'input window, operand 0, single buffered']
    #allocation3 [shape = 's32[1]{0}', space=sflag, size = 0x4, scoped, tag = 'scoped memory for tpu_custom_call.1']
    #allocation4 [shape = 's32[1]{0}', space=sflag, size = 0x4, scoped, tag = 'scoped memory for tpu_custom_call.1']
    #allocation5 [shape = 'u8[4096]{0}', space=vmem, size = 0x1000, scoped, tag = 'input window, operand 1, single buffered']
    #allocation6 [shape = 's32[1]{0}', space=sflag, size = 0x4, scoped, tag = 'scoped memory for tpu_custom_call.1']
    #allocation7 [shape = 'u8[4096]{0}', space=vmem, size = 0x1000, scoped, tag = 'output window, operand 0, single buffered']
    %7 = vsyncpa [#allocation3], 0
    %8 = vsyncpa [#allocation6], 0
    %9 = vsyncpa [#allocation4], 0
    // Predicated region
    $region2: #{tpu_custom_call.1} parent=1 // pred_check
      _
    $region3: #{tpu_custom_call.1} parent=1 // pred_check_branch
      %11 = sbr.rel (0) target = $region5
    $region4: #{tpu_custom_call.1} parent=1 // pred_region
      %s13 = ssub.s32 128, 128
      %14 = vsyncadd [#allocation3], %s13
      %s16 = sshll.u32 [#allocation2], 4
      %s17 = int_to_ptr.vmem [resolvable:$true] %s16
      %19 = dma.hbm_to_vmem [thread:$0]  %s0, 128, %s17, [#allocation3]
    $region5: #{tpu_custom_call.1} parent=1 // pred_fallthru
      _
    // Predicated region
    $region6: #{tpu_custom_call.1} parent=1 // pred_check
      _
    $region7: #{tpu_custom_call.1} parent=1 // pred_check_branch
      %21 = sbr.rel (0) target = $region9
    $region8: #{tpu_custom_call.1} parent=1 // pred_region
      %s23 = ssub.s32 128, 128
      %24 = vsyncadd [#allocation6], %s23
      %s26 = sshll.u32 [#allocation5], 4
      %s27 = int_to_ptr.vmem [resolvable:$true] %s26
      %29 = dma.hbm_to_vmem [thread:$0]  %s1, 128, %s27, [#allocation6]
    $region9: #{tpu_custom_call.1} parent=1 // pred_fallthru
      _
    // Predicated region
    $region10: #{tpu_custom_call.1} parent=1 // pred_check
      _
    $region11: #{tpu_custom_call.1} parent=1 // pred_check_branch
      %31 = sbr.rel (0) target = $region13
    $region12: #{tpu_custom_call.1} parent=1 // pred_region
      %32 = dma.done [#allocation3], 128
    $region13: #{tpu_custom_call.1} parent=1 // pred_fallthru
      _
    // Predicated region
    $region14: #{tpu_custom_call.1} parent=1 // pred_check
      _
    $region15: #{tpu_custom_call.1} parent=1 // pred_check_branch
      %34 = sbr.rel (0) target = $region17
    $region16: #{tpu_custom_call.1} parent=1 // pred_region
      %35 = dma.done [#allocation6], 128
    $region17: #{tpu_custom_call.1} parent=1 // pred_fallthru
      _
    %v36 = vld [vmem:[#allocation2] sm:$0xff]
    %v37 = vld [vmem:[#allocation5] sm:$0xff]
    %v38 = vadd.f32 %v36, %v37
    %39 = vst [vmem:[#allocation7] sm:$0xff] %v38
    // Predicated region
    $region18: #{tpu_custom_call.1} parent=1 // pred_check
      _
    $region19: #{tpu_custom_call.1} parent=1 // pred_check_branch
      %41 = sbr.rel (0) target = $region21
    $region20: #{tpu_custom_call.1} parent=1 // pred_region
      %s43 = ssub.s32 128, 128
      %44 = vsyncadd [#allocation4], %s43
      %s46 = sshll.u32 [#allocation7], 4
      %s47 = int_to_ptr.vmem [resolvable:$true] %s46
      %49 = dma.vmem_to_hbm [thread:$0]  %s47, 128, %s2, [#allocation4]
    $region21: #{tpu_custom_call.1} parent=1 // pred_fallthru
      _
    // Predicated region
    $region22: #{tpu_custom_call.1} parent=1 // pred_check
      _
    $region23: #{tpu_custom_call.1} parent=1 // pred_check_branch
      %51 = sbr.rel (0) target = $region25
    $region24: #{tpu_custom_call.1} parent=1 // pred_region
      %52 = dma.done [#allocation4], 128
    $region25: #{tpu_custom_call.1} parent=1 // pred_fallthru
      _
    %53 = vsyncpa [#allocation3], 1
    %54 = vsyncpa [#allocation6], 1
    %55 = vsyncpa [#allocation4], 1

</llo_original>
